<compile_context>
chip_gen: v5e
topology: v5e:2x2
jax: 0.10.0
libtpu: 0.0.40
codegen_flags: <defaults>
</compile_context>

<pallas_src>
import functools

import jax
import jax.numpy as jnp
from jax import lax
from jax.experimental import pallas as pl
from jax.experimental.pallas import tpu as pltpu


_LANE = 128
_F32 = 4
# VMEM budget shared by the double-buffered feature stream and resident buffers.
_STREAM_BUDGET_BYTES = 20 * 1024 * 1024
# Safe scoped-VMEM ceiling across v5e / v6e / v7x.
_VMEM_LIMIT_BYTES = 40 * 1024 * 1024
_TK_MAX = 4096


def _choose_tk(m, k, itemsize, resident_bytes):
    """Pick the k-tile: whole-k if it fits; else lane-aligned, preferring divisors of k."""
    budget = _STREAM_BUDGET_BYTES - resident_bytes
    budget = max(budget, 2 * m * _LANE * itemsize)   # never below a single lane tile
    if 2 * m * k * itemsize <= budget:
        return int(k)                                # single k step, no padding needed
    tk_cap = budget // (2 * m * itemsize)
    tk_cap = max(_LANE, (tk_cap // _LANE) * _LANE)
    tk_cap = int(min(tk_cap, _TK_MAX))
    # Prefer a lane-aligned tile that divides k evenly: avoids the HBM pad copy.
    for cand in range(tk_cap, _LANE - 1, -_LANE):
        if k % cand == 0:
            return int(cand)
    return tk_cap


def _pad_features(feats, tk):
    """Zero-pad k up to a multiple of tk (zero columns do not change F @ F^T)."""
    _, k = feats.shape
    nk = pl.cdiv(k, tk)
    kp = nk * tk
    if kp != k:
        feats = jnp.pad(feats, ((0, 0), (0, kp - k)))
    return feats, int(nk)


# ----------------------------------------------------------------------------
# Kernels
# ----------------------------------------------------------------------------
def _gram_kernel(f_ref, g_ref, *, inv_norm):
    """G += F_tile @ F_tile^T over the k grid; scale by inv_norm at the end.

    The output block index is constant across the k axis, so g_ref stays
    resident in VMEM and doubles as the f32 accumulator (written back once).
    """
    kk = pl.program_id(0)

    @pl.when(kk == 0)
    def _():
        g_ref[...] = jnp.zeros_like(g_ref)

    f = f_ref[...]
    # F @ F^T without materializing a transpose: contract dim 1 of both operands.
    g_ref[...] += lax.dot_general(
        f, f, (((1,), (1,)), ((), ())), preferred_element_type=jnp.float32)

    @pl.when(kk == pl.num_programs(0) - 1)
    def _():
        g_ref[...] *= inv_norm


def _style_loss_kernel(f_ref, tgt_ref, loss_ref, acc_ref, *, inv_norm,
                       inv_numel):
    """Fused: Gram of input features (k-reduction) + MSE vs. resident target."""
    kk = pl.program_id(0)

    @pl.when(kk == 0)
    def _():
        acc_ref[...] = jnp.zeros_like(acc_ref)

    f = f_ref[...]
    acc_ref[...] += lax.dot_general(
        f, f, (((1,), (1,)), ((), ())), preferred_element_type=jnp.float32)

    # MSE only after the full k reduction, against the normalized Gram.
    @pl.when(kk == pl.num_programs(0) - 1)
    def _():
        diff = acc_ref[...] * inv_norm - tgt_ref[...].astype(jnp.float32)
        loss_ref[0, 0] = jnp.sum(diff * diff) * inv_numel   # mse 'mean'


# ----------------------------------------------------------------------------
# Wrappers
# ----------------------------------------------------------------------------
def gram_matrix_pallas(x, *, tk=None):
    """Pallas equivalent of gram_matrix(x) for an NCHW input x."""
    a, b, c, d = x.shape
    m, k = a * b, c * d
    feats = x.reshape(m, k)                         # native dtype (bf16 stays bf16)
    itemsize = feats.dtype.itemsize
    if tk is None:
        # Resident: output Gram (conservatively count 2 buffers).
        tk = _choose_tk(m, k, itemsize, resident_bytes=2 * m * m * _F32)
    feats, nk = _pad_features(feats, tk)
    inv_norm = 1.0 / float(a * b * c * d)

    cost = pl.CostEstimate(
        flops=2 * m * m * k,
        transcendentals=0,
        bytes_accessed=m * k * itemsize + m * m * _F32)

    return pl.pallas_call(
        functools.partial(_gram_kernel, inv_norm=inv_norm),
        out_shape=jax.ShapeDtypeStruct((m, m), jnp.float32),
        grid_spec=pltpu.PrefetchScalarGridSpec(
            num_scalar_prefetch=0,
            grid=(nk,),
            in_specs=[pl.BlockSpec((m, tk), lambda kk: (0, kk))],
            out_specs=pl.BlockSpec((m, m), lambda kk: (0, 0)),
        ),
        compiler_params=pltpu.CompilerParams(
            dimension_semantics=("arbitrary",),
            vmem_limit_bytes=_VMEM_LIMIT_BYTES),
        cost_estimate=cost,
    )(feats)


def style_loss_forward(x, target_gram, *, tk=None):
    """StyleLoss.forward: returns (input_unchanged, mse_loss_scalar)."""
    a, b, c, d = x.shape
    m, k = a * b, c * d
    feats = x.reshape(m, k)                         # native dtype feature stream
    itemsize = feats.dtype.itemsize
    if tk is None:
        # Resident: target Gram (2 buffers, conservatively) + f32 accumulator.
        tk = _choose_tk(m, k, itemsize, resident_bytes=3 * m * m * _F32)
    feats, nk = _pad_features(feats, tk)
    inv_norm = 1.0 / float(a * b * c * d)
    inv_numel = 1.0 / float(m * m)

    cost = pl.CostEstimate(
        flops=2 * m * m * k,
        transcendentals=0,
        bytes_accessed=m * k * itemsize + m * m * _F32)

    loss = pl.pallas_call(
        functools.partial(
            _style_loss_kernel, inv_norm=inv_norm, inv_numel=inv_numel),
        out_shape=jax.ShapeDtypeStruct((1, 1), jnp.float32),
        grid_spec=pltpu.PrefetchScalarGridSpec(
            num_scalar_prefetch=0,
            grid=(nk,),
            in_specs=[
                pl.BlockSpec((m, tk), lambda kk: (0, kk)),
                # Same block every k step -> DMA'd once, stays VMEM-resident.
                pl.BlockSpec((m, m), lambda kk: (0, 0)),
            ],
            out_specs=pl.BlockSpec((1, 1), lambda kk: (0, 0),
                                   memory_space=pltpu.SMEM),
            scratch_shapes=[pltpu.VMEM((m, m), jnp.float32)],
        ),
        compiler_params=pltpu.CompilerParams(
            dimension_semantics=("arbitrary",),
            vmem_limit_bytes=_VMEM_LIMIT_BYTES),
        cost_estimate=cost,
    )(feats, target_gram)

    # forward() returns the input unchanged; the loss is a side value.
    return x, loss[0, 0]


class StyleLossPallas:
    """Mirror of the PyTorch StyleLoss module."""

    def __init__(self, target_feature):
        self.target = gram_matrix_pallas(target_feature)   # detached constant
        self.loss = None

    def __call__(self, x):
        out, self.loss = style_loss_forward(x, self.target)
        return out


# ----------------------------------------------------------------------------
# Main
# ----------------------------------------------------------------------------
if __name__ == "__main__":
    key = jax.random.PRNGKey(0)
    k_tgt, k_in, k_tgt2, k_in2 = jax.random.split(key, 4)

    def gram_ref(t):
        aa, bb, cc, dd = t.shape
        f = t.reshape(aa * bb, cc * dd).astype(jnp.float32)
        return (f @ f.T) / (aa * bb * cc * dd)

    # --- Test 1: toy NCHW feature map (single k step) -----------------------
    a, b, c, d = 2, 4, 16, 16
    target_feature = jax.random.normal(k_tgt, (a, b, c, d), dtype=jnp.float32)
    x = jax.random.normal(k_in, (a, b, c, d), dtype=jnp.float32)

    module = StyleLossPallas(target_feature)
    out = jax.block_until_ready(module(x))
    loss = jax.block_until_ready(module.loss)

    loss_ref = jnp.mean((gram_ref(x) - gram_ref(target_feature)) ** 2)
    assert out.shape == x.shape
    assert jnp.allclose(out, x)
    assert jnp.allclose(loss, loss_ref, rtol=1e-5, atol=1e-6)

    # --- Test 2: exercise the k-reduction grid (tk < k, with zero-padding) --
    a2, b2, c2, d2 = 1, 16, 16, 24            # m=16, k=384; tk=256 -> 2 steps
    tf2 = jax.random.normal(k_tgt2, (a2, b2, c2, d2), dtype=jnp.float32)
    x2 = jax.random.normal(k_in2, (a2, b2, c2, d2), dtype=jnp.float32)

    tgt_g2 = gram_matrix_pallas(tf2, tk=256)
    _, loss2 = style_loss_forward(x2, tgt_g2, tk=256)
    tgt_g2 = jax.block_until_ready(tgt_g2)
    loss2 = jax.block_until_ready(loss2)

    loss2_ref = jnp.mean((gram_ref(x2) - gram_ref(tf2)) ** 2)
    assert jnp.allclose(tgt_g2, gram_ref(tf2), rtol=1e-5, atol=1e-5)
    assert jnp.allclose(loss2, loss2_ref, rtol=1e-5, atol=1e-6)

    # --- Test 3: evenly-dividing k tile (no HBM pad copy path) --------------
    a3, b3, c3, d3 = 1, 16, 16, 16            # m=16, k=256; tk=128 -> 2 steps
    tf3 = jax.random.normal(k_tgt, (a3, b3, c3, d3), dtype=jnp.float32)
    x3 = jax.random.normal(k_in, (a3, b3, c3, d3), dtype=jnp.float32)
    tgt_g3 = gram_matrix_pallas(tf3, tk=128)
    _, loss3 = style_loss_forward(x3, tgt_g3, tk=128)
    loss3 = jax.block_until_ready(loss3)
    loss3_ref = jnp.mean((gram_ref(x3) - gram_ref(tf3)) ** 2)
    assert jnp.allclose(loss3, loss3_ref, rtol=1e-5, atol=1e-6)

    print("KERNEL_OK")
</pallas_src>

<mosaic_0001>
module attributes {stable_mosaic.version = 11 : i64} {
  func.func @_gram_kernel(%arg0: i32, %arg1: memref<8x256xf32, #tpu.memory_space<vmem>>, %arg2: memref<8x8xf32, #tpu.memory_space<vmem>>) attributes {dimension_semantics = [#tpu.dimension_semantics<arbitrary>], iteration_bounds = array<i64: 1>, scalar_prefetch = 0 : i64, scratch_operands = 0 : i64, tpu.core_type = #tpu.core_type<tc>, window_params = [{transform_indices = @transform_0, window_bounds = array<i64: 8, 256>}, {pipeline_mode = #tpu.pipeline_mode<synchronous>, transform_indices = @transform_1, window_bounds = array<i64: 8, 8>}]} {
    %c0_i32 = arith.constant 0 : i32
    %0 = arith.cmpi eq, %arg0, %c0_i32 : i32
    %1 = arith.extui %0 : i1 to i32
    %c0_i32_0 = arith.constant 0 : i32
    %2 = arith.cmpi ne, %1, %c0_i32_0 : i32
    scf.if %2 {
      %cst_8 = arith.constant 0.000000e+00 : f32
      %11 = vector.broadcast %cst_8 : f32 to vector<8x8xf32>
      %c0_9 = arith.constant 0 : index
      %c0_10 = arith.constant 0 : index
      %12 = vector.load %arg2[%c0_9, %c0_10] : memref<8x8xf32, #tpu.memory_space<vmem>>, vector<8x8xf32>
      tpu.vector_store %arg2[%c0_9, %c0_10], %11 {strides = array<i32>} : memref<8x8xf32, #tpu.memory_space<vmem>>, vector<8x8xf32>,
    } else {
    }
    %c0 = arith.constant 0 : index
    %c0_1 = arith.constant 0 : index
    %3 = vector.load %arg1[%c0, %c0_1] : memref<8x256xf32, #tpu.memory_space<vmem>>, vector<8x256xf32>
    %c0_2 = arith.constant 0 : index
    %c0_3 = arith.constant 0 : index
    %4 = vector.load %arg2[%c0_2, %c0_3] : memref<8x8xf32, #tpu.memory_space<vmem>>, vector<8x8xf32>
    %cst = arith.constant dense<0.000000e+00> : vector<8x8xf32>
    %5 = tpu.matmul %3, %3, %cst {dimension_numbers = #tpu.dot_dimension_numbers<[1], [1], [0], [0], [0, 0, 1, 0], [], []>} : vector<8x256xf32>, vector<8x256xf32>, vector<8x8xf32> -> vector<8x8xf32>
    %6 = arith.addf %4, %5 : vector<8x8xf32>
    %c0_4 = arith.constant 0 : index
    %c0_5 = arith.constant 0 : index
    %7 = vector.load %arg2[%c0_4, %c0_5] : memref<8x8xf32, #tpu.memory_space<vmem>>, vector<8x8xf32>
    tpu.vector_store %arg2[%c0_4, %c0_5], %6 {strides = array<i32>} : memref<8x8xf32, #tpu.memory_space<vmem>>, vector<8x8xf32>,
    %c0_i32_6 = arith.constant 0 : i32
    %8 = arith.cmpi eq, %arg0, %c0_i32_6 : i32
    %9 = arith.extui %8 : i1 to i32
    %c0_i32_7 = arith.constant 0 : i32
    %10 = arith.cmpi ne, %9, %c0_i32_7 : i32
    scf.if %10 {
      %c0_8 = arith.constant 0 : index
      %c0_9 = arith.constant 0 : index
      %11 = vector.load %arg2[%c0_8, %c0_9] : memref<8x8xf32, #tpu.memory_space<vmem>>, vector<8x8xf32>
      %cst_10 = arith.constant 4.8828125E-4 : f32
      %12 = vector.broadcast %cst_10 : f32 to vector<8x8xf32>
      %13 = arith.mulf %11, %12 : vector<8x8xf32>
      %c0_11 = arith.constant 0 : index
      %c0_12 = arith.constant 0 : index
      %14 = vector.load %arg2[%c0_11, %c0_12] : memref<8x8xf32, #tpu.memory_space<vmem>>, vector<8x8xf32>
      tpu.vector_store %arg2[%c0_11, %c0_12], %13 {strides = array<i32>} : memref<8x8xf32, #tpu.memory_space<vmem>>, vector<8x8xf32>,
    } else {
    }
    return
  }
  func.func @transform_0(%arg0: i32) -> (i32, i32) {
    %c0_i32 = arith.constant 0 : i32
    %c0_i32_0 = arith.constant 0 : i32
    return %c0_i32, %arg0 : i32, i32
  }
  func.func @transform_1(%arg0: i32) -> (i32, i32) {
    %c0_i32 = arith.constant 0 : i32
    %c0_i32_0 = arith.constant 0 : i32
    %c0_i32_1 = arith.constant 0 : i32
    return %c0_i32, %c0_i32_0 : i32, i32
  }
}

</mosaic_0001>

<llo_original>
// kernel: tpu_custom_call.1
$region0: #{tpu_custom_call.1}
  #allocation0 [shape = 'u32[]', space=smem, size = 0x4, offset = 0x4, fixed_abs, tag = 'smem constant byte address 0x4 - core index']
  #allocation1 [shape = 'u32[72,128]{1,0:T(1,128)}', space=vmem, size = 0x9000, scoped, tag = 'internal scratch']
  %s0 = inlined_call_operand.hbm [shape: f32[8,256], index: 0, kind: input, shape index: {}]
  %s1 = inlined_call_operand.hbm [shape: f32[8,8], index: 1, kind: output, shape index: {}]
  %s2 = sld [smem:[#allocation0]]
  $region26: #{tpu_custom_call.1} parent=0
    _
  %s4 = ssub.s32 1, %s2
  %s5 = scalar_select 0, %s4, %s2
  $region1: #{tpu_custom_call.1} parent=0
    #allocation2 [shape = 'u8[8192]{0}', space=vmem, size = 0x2000, scoped, tag = 'input window, operand 0, single buffered']
    #allocation3 [shape = 's32[1]{0}', space=sflag, size = 0x4, scoped, tag = 'scoped memory for tpu_custom_call.1']
    #allocation4 [shape = 's32[1]{0}', space=sflag, size = 0x4, scoped, tag = 'scoped memory for tpu_custom_call.1']
    #allocation5 [shape = 'u8[4096]{0}', space=vmem, size = 0x1000, scoped, tag = 'output window, operand 0, single buffered']
    %6 = vsyncpa [#allocation3], 0
    %7 = vsyncpa [#allocation4], 0
    // Predicated region
    $region2: #{tpu_custom_call.1} parent=1 // pred_check
      _
    $region3: #{tpu_custom_call.1} parent=1 // pred_check_branch
      %9 = sbr.rel (0) target = $region5
    $region4: #{tpu_custom_call.1} parent=1 // pred_region
      %11 = vsyncadd [#allocation3], 0
      %s13 = sshll.u32 %s0, 4
      %s14 = int_to_ptr.hbm [resolvable:$true] %s13
      %s15 = sshll.u32 [#allocation2], 4
      %s16 = int_to_ptr.vmem [resolvable:$true] %s15
      %18 = dma.hbm_to_vmem [thread:$0]  %s14, 256, %s16, [#allocation3]
    $region5: #{tpu_custom_call.1} parent=1 // pred_fallthru
      _
    // Predicated region
    $region6: #{tpu_custom_call.1} parent=1 // pred_check
      _
    $region7: #{tpu_custom_call.1} parent=1 // pred_check_branch
      %20 = sbr.rel (0) target = $region9
    $region8: #{tpu_custom_call.1} parent=1 // pred_region
      %22 = dma.done [#allocation3], 256
    $region9: #{tpu_custom_call.1} parent=1 // pred_fallthru
      _
    %p23 = scmp.eq.s32.totalorder 0, 0
    // Predicated region
    $region10: #{tpu_custom_call.1} parent=1 // pred_check
      %p24 = pneg %p23
    $region11: #{tpu_custom_call.1} parent=1 // pred_check_branch
      %26 = sbr.rel (%p24) target = $region13
    $region12: #{tpu_custom_call.1} parent=1 // pred_region
      %vm27 = vcmask 64512
      %28 = vst.msk [vmem:[#allocation5] sm:$0xff] %vm27, 0.0
    $region13: #{tpu_custom_call.1} parent=1 // pred_fallthru
      _
    %v29 = vld [vmem:[#allocation2] sm:$0xff]
    %v30 = vld [vmem:[#allocation2 + $0x8] sm:$0xff]
    %v31 = vld [vmem:[#allocation5] sm:$0xff]
    %32 = vmatpush.xpose.msra.mxu0 0.0
    %33 = vmatpush.xpose.msra.mxu0 0.0
    %34 = vmatpush.xpose.msra.mxu0 0.0
    %35 = vmatpush.xpose.msra.mxu0 0.0
    %36 = vmatpush.xpose.msra.mxu0 0.0
    %37 = vmatpush.xpose.msra.mxu0 0.0
    %38 = vmatpush.xpose.msra.mxu0 0.0
    %39 = vmatpush.xpose.msra.mxu0 0.0
    %40 = vmatpush.xpose.msra.mxu0 0.0
    %41 = vmatpush.xpose.msra.mxu0 0.0
    %42 = vmatpush.xpose.msra.mxu0 0.0
    %43 = vmatpush.xpose.msra.mxu0 0.0
    %44 = vmatpush.xpose.msra.mxu0 0.0
    %45 = vmatpush.xpose.msra.mxu0 0.0
    %46 = vmatpush.xpose.msra.mxu0 0.0
    %47 = vmatpush.xpose.msra.mxu0 %v29
    %48 = vmatmul.f32.gmra.mxu0 %v29
    %v49 = vpop.f32.mrf.mxu0
    %v50 = vadd.f32 0.0, %v49
    %51 = vdwg.mxu0
    %52 = vmatpush.xpose.msra.mxu0 0.0
    %53 = vmatpush.xpose.msra.mxu0 0.0
    %54 = vmatpush.xpose.msra.mxu0 0.0
    %55 = vmatpush.xpose.msra.mxu0 0.0
    %56 = vmatpush.xpose.msra.mxu0 0.0
    %57 = vmatpush.xpose.msra.mxu0 0.0
    %58 = vmatpush.xpose.msra.mxu0 0.0
    %59 = vmatpush.xpose.msra.mxu0 0.0
    %60 = vmatpush.xpose.msra.mxu0 0.0
    %61 = vmatpush.xpose.msra.mxu0 0.0
    %62 = vmatpush.xpose.msra.mxu0 0.0
    %63 = vmatpush.xpose.msra.mxu0 0.0
    %64 = vmatpush.xpose.msra.mxu0 0.0
    %65 = vmatpush.xpose.msra.mxu0 0.0
    %66 = vmatpush.xpose.msra.mxu0 0.0
    %67 = vmatpush.xpose.msra.mxu0 %v30
    %68 = vmatmul.f32.gmra.mxu0 %v30
    %v69 = vpop.f32.mrf.mxu0
    %v70 = vadd.f32 %v50, %v69
    %71 = vdwg.mxu0
    %v72 = vadd.f32 %v31, %v70
    %vm73 = vcmask 64512
    %74 = vst.msk [vmem:[#allocation5] sm:$0xff] %vm73, %v72
    // Predicated region
    $region14: #{tpu_custom_call.1} parent=1 // pred_check
      %p75 = pneg %p23
    $region15: #{tpu_custom_call.1} parent=1 // pred_check_branch
      %77 = sbr.rel (%p75) target = $region17
    $region16: #{tpu_custom_call.1} parent=1 // pred_region
      %v78 = vld [vmem:[#allocation5] sm:$0xff]
      %v79 = vmul.f32 %v78, 0.00048828125
      %80 = vst.msk [vmem:[#allocation5] sm:$0xff] %vm73, %v79
    $region17: #{tpu_custom_call.1} parent=1 // pred_fallthru
      _
    // Predicated region
    $region18: #{tpu_custom_call.1} parent=1 // pred_check
      _
    $region19: #{tpu_custom_call.1} parent=1 // pred_check_branch
      %82 = sbr.rel (0) target = $region21
    $region20: #{tpu_custom_call.1} parent=1 // pred_region
      %84 = vsyncadd [#allocation4], 0
      %s86 = sshll.u32 [#allocation5], 4
      %s87 = int_to_ptr.vmem [resolvable:$true] %s86
      %s88 = sshll.u32 %s1, 4
      %s89 = int_to_ptr.hbm [resolvable:$true] %s88
      %91 = dma.vmem_to_hbm [thread:$0]  %s87, 128, %s89, [#allocation4]
    $region21: #{tpu_custom_call.1} parent=1 // pred_fallthru
      _
    // Predicated region
    $region22: #{tpu_custom_call.1} parent=1 // pred_check
      _
    $region23: #{tpu_custom_call.1} parent=1 // pred_check_branch
      %93 = sbr.rel (0) target = $region25
    $region24: #{tpu_custom_call.1} parent=1 // pred_region
      %95 = dma.done [#allocation4], 128
    $region25: #{tpu_custom_call.1} parent=1 // pred_fallthru
      _
    %96 = vsyncpa [#allocation3], 1
    %97 = vsyncpa [#allocation4], 1

</llo_original>
